<compile_context>
chip_gen: v7x
topology: tpu7x:2x2x1
jax: 0.10.0
libtpu: 0.0.40
codegen_flags: <defaults>
</compile_context>

<pallas_src>
import jax
import jax.numpy as jnp
from jax.experimental import pallas as pl
from jax.experimental.pallas import tpu as pltpu


def _round_up(a, m):
    return -(-a // m) * m


def _vmem_capacity_bytes():
    """Per-generation VMEM capacity (v5e/v6e: 128 MiB, v7x: 64 MiB)."""
    try:
        return int(pltpu.get_tpu_info().vmem_capacity_bytes)
    except Exception:
        return 64 * 1024 * 1024          # conservative (v7x-sized) fallback


def _pick_tiles(W, V, N, vmem_budget_bytes):
    """Pick (TW, TN) so the double-buffered A(f32)/x(bf16)/out(f32) blocks fit."""

    def live_bytes(tw, tn):
        a_blk = _round_up(tw, 8) * _round_up(V, 128) * 4   # A tile, f32
        x_blk = _round_up(V, 8) * _round_up(tn, 128) * 2   # x tile, bf16
        o_blk = _round_up(tw, 8) * _round_up(tn, 128) * 4  # out tile, f32
        return 2 * (a_blk + x_blk + o_blk)                 # double-buffered

    tw, tn = W, N                     # whole problem per step when it fits
    while live_bytes(tw, tn) > vmem_budget_bytes and max(tw, tn) > 256:
        if tn >= tw and tn > 256:     # keep MXU N >= 256 and 128-aligned
            tn = max(256, _round_up(tn // 2, 128))
        else:
            tw = max(256, _round_up(tw // 2, 8))
    return tw, tn


def _nconv_matmul_kernel(a_ref, x_ref, o_ref):
    # a_ref: (TW, V)  float32   support rows (weight-stationary lhs)
    # x_ref: (V, TN)  bfloat16  re-laid-out activations, TN = C*L lane-dense
    # o_ref: (TW, TN) float32
    a = a_ref[...].astype(jnp.bfloat16)          # cast at the MXU, not in HBM
    o_ref[...] = jnp.dot(a, x_ref[...], preferred_element_type=jnp.float32)


@jax.jit
def nconv(x, A):
    """Pallas TPU equivalent of STFDGCN nconv.forward.

    x: (B, C, V, L) float32
    A: (V, W) static support or (B, W, V) dynamic support.
    Returns float32 (B, C, W, L) (torch's contiguous ncwl output).
    """
    B, C, V, L = x.shape
    if A.ndim == 3:                              # einsum('ncvl,nwv->ncwl')
        assert A.shape[0] == B and A.shape[2] == V, (A.shape, x.shape)
        a3 = A.astype(jnp.float32)               # (B, W, V), cast to bf16 in-kernel
        a_index = lambda b, w, n: (b, w, 0)
    else:                                        # einsum('ncvl,vw->ncwl')
        assert A.ndim == 2 and A.shape[0] == V, (A.shape, x.shape)
        a3 = A.T[None].astype(jnp.float32)       # (1, W, V), tiny, one-time
        a_index = lambda b, w, n: (0, w, 0)      # constant -> stays VMEM-resident
    W = a3.shape[1]
    N = C * L

    # Lane-dense re-layout (one fused transpose + bf16 cast): the kernel's
    # matmul N dim (= C*L) lands on the 128-wide lane axis.
    xt = jnp.transpose(x, (0, 2, 1, 3)).reshape(B, V, N).astype(jnp.bfloat16)

    vmem_cap = _vmem_capacity_bytes()
    tw, tn = _pick_tiles(W, V, N, int(vmem_cap * 0.6))

    # Give both v7x TensorCores work even when one step would cover everything.
    if B * pl.cdiv(W, tw) * pl.cdiv(N, tn) < 2 and W >= 16:
        tw = _round_up((W + 1) // 2, 8)

    grid = (B, pl.cdiv(W, tw), pl.cdiv(N, tn))

    cost = pl.CostEstimate(
        flops=2 * B * W * V * N,
        transcendentals=0,
        bytes_accessed=a3.size * 4 + B * V * N * 2 + B * W * N * 4,
    )

    out_t = pl.pallas_call(
        _nconv_matmul_kernel,
        out_shape=jax.ShapeDtypeStruct((B, W, N), jnp.float32),
        grid=grid,
        in_specs=[
            pl.BlockSpec((None, tw, V), a_index),
            pl.BlockSpec((None, V, tn), lambda b, w, n: (b, 0, n)),
        ],
        out_specs=pl.BlockSpec((None, tw, tn), lambda b, w, n: (b, w, n)),
        compiler_params=pltpu.CompilerParams(
            dimension_semantics=("parallel", "parallel", "parallel"),
            vmem_limit_bytes=int(vmem_cap * 0.9)),
        cost_estimate=cost,
    )(a3, xt)

    # Undo the re-layout: (B, W, C*L) -> (B, C, W, L).
    # TODO(synk): fold this ncwl re-layout into the downstream consumer to
    # drop one HBM pass when nconv feeds another custom kernel.
    return jnp.transpose(out_t.reshape(B, W, C, L), (0, 2, 1, 3))


def _nconv_ref_bf16(x, A):
    # Same bf16-operand / f32-accumulate contraction as the kernel.
    xr = x.astype(jnp.bfloat16).astype(jnp.float32)
    ar = A.astype(jnp.bfloat16).astype(jnp.float32)
    if A.ndim == 3:
        return jnp.einsum('ncvl,nwv->ncwl', xr, ar)
    return jnp.einsum('ncvl,vw->ncwl', xr, ar)


if __name__ == "__main__":
    key = jax.random.PRNGKey(0)
    kx, ka, kd = jax.random.split(key, 3)

    # Small shapes consistent with STFDGCN usage: x is (batch, channels, nodes, time).
    B, C, V, L = 2, 8, 16, 12
    x = jax.random.normal(kx, (B, C, V, L), jnp.float32)

    # Static support (V, W): row-normalized random adjacency.
    a_static = jax.random.uniform(ka, (V, V), jnp.float32, 1e-3, 1.0)
    a_static = a_static / jnp.sum(a_static, axis=1, keepdims=True)

    # Dynamic support (B, W, V): per-batch softmax adjacency.
    a_dyn = jax.nn.softmax(jax.random.normal(kd, (B, V, V), jnp.float32), axis=-1)

    out_s = jax.block_until_ready(nconv(x, a_static))   # A.dim() == 2 branch
    out_d = jax.block_until_ready(nconv(x, a_dyn))      # A.dim() == 3 branch

    assert out_s.shape == (B, C, V, L), out_s.shape
    assert out_d.shape == (B, C, V, L), out_d.shape
    assert bool(jnp.all(jnp.isfinite(out_s)))
    assert bool(jnp.all(jnp.isfinite(out_d)))

    # Tight check against the same bf16-operand / f32-accumulate contraction.
    assert bool(jnp.allclose(out_s, _nconv_ref_bf16(x, a_static), atol=2e-4, rtol=2e-4))
    assert bool(jnp.allclose(out_d, _nconv_ref_bf16(x, a_dyn), atol=2e-4, rtol=2e-4))

    # Loose sanity check against the full-f32 torch einsum semantics
    # (difference is only the bf16 operand rounding).
    ref_s32 = jnp.einsum('ncvl,vw->ncwl', x, a_static)
    ref_d32 = jnp.einsum('ncvl,nwv->ncwl', x, a_dyn)
    assert bool(jnp.allclose(out_s, ref_s32, atol=6e-2, rtol=6e-2))
    assert bool(jnp.allclose(out_d, ref_d32, atol=6e-2, rtol=6e-2))

    print("KERNEL_OK")
</pallas_src>

<mosaic_0001>
module attributes {stable_mosaic.version = 11 : i64} {
  func.func @_nconv_matmul_kernel(%arg0: i32, %arg1: i32, %arg2: i32, %arg3: memref<1x16x16xf32, #tpu.memory_space<vmem>>, %arg4: memref<1x16x96xbf16, #tpu.memory_space<vmem>>, %arg5: memref<1x16x96xf32, #tpu.memory_space<vmem>>) attributes {dimension_semantics = [#tpu.dimension_semantics<parallel>, #tpu.dimension_semantics<parallel>, #tpu.dimension_semantics<parallel>], iteration_bounds = array<i64: 2, 1, 1>, scalar_prefetch = 0 : i64, scratch_operands = 0 : i64, tpu.core_type = #tpu.core_type<tc>, window_params = [{transform_indices = @transform_0, window_bounds = array<i64: 1, 16, 16>}, {transform_indices = @transform_1, window_bounds = array<i64: 1, 16, 96>}, {transform_indices = @transform_2, window_bounds = array<i64: 1, 16, 96>}]} {
    %c0 = arith.constant 0 : index
    %c0_0 = arith.constant 0 : index
    %c0_1 = arith.constant 0 : index
    %0 = vector.load %arg3[%c0, %c0_0, %c0_1] : memref<1x16x16xf32, #tpu.memory_space<vmem>>, vector<1x16x16xf32>
    %1 = vector.shape_cast %0 : vector<1x16x16xf32> to vector<16x16xf32>
    %2 = arith.truncf %1 : vector<16x16xf32> to vector<16x16xbf16>
    %c0_2 = arith.constant 0 : index
    %c0_3 = arith.constant 0 : index
    %c0_4 = arith.constant 0 : index
    %3 = vector.load %arg4[%c0_2, %c0_3, %c0_4] : memref<1x16x96xbf16, #tpu.memory_space<vmem>>, vector<1x16x96xbf16>
    %4 = vector.shape_cast %3 : vector<1x16x96xbf16> to vector<16x96xbf16>
    %cst = arith.constant dense<0.000000e+00> : vector<16x96xf32>
    %5 = tpu.matmul %2, %4, %cst {dimension_numbers = #tpu.dot_dimension_numbers<[1], [0], [0], [1], [0, 0, 1, 1], [], []>} : vector<16x16xbf16>, vector<16x96xbf16>, vector<16x96xf32> -> vector<16x96xf32>
    %c0_5 = arith.constant 0 : index
    %c0_6 = arith.constant 0 : index
    %c0_7 = arith.constant 0 : index
    %6 = vector.load %arg5[%c0_5, %c0_6, %c0_7] : memref<1x16x96xf32, #tpu.memory_space<vmem>>, vector<1x16x96xf32>
    %7 = vector.shape_cast %6 : vector<1x16x96xf32> to vector<16x96xf32>
    %8 = vector.shape_cast %5 : vector<16x96xf32> to vector<1x16x96xf32>
    tpu.vector_store %arg5[%c0_5, %c0_6, %c0_7], %8 {strides = array<i32>} : memref<1x16x96xf32, #tpu.memory_space<vmem>>, vector<1x16x96xf32>,
    return
  }
  func.func @transform_0(%arg0: i32, %arg1: i32, %arg2: i32) -> (i32, i32, i32) {
    %c0_i32 = arith.constant 0 : i32
    %c0_i32_0 = arith.constant 0 : i32
    %c0_i32_1 = arith.constant 0 : i32
    return %c0_i32, %arg1, %c0_i32_0 : i32, i32, i32
  }
  func.func @transform_1(%arg0: i32, %arg1: i32, %arg2: i32) -> (i32, i32, i32) {
    %c0_i32 = arith.constant 0 : i32
    %c0_i32_0 = arith.constant 0 : i32
    return %arg0, %c0_i32, %arg2 : i32, i32, i32
  }
  func.func @transform_2(%arg0: i32, %arg1: i32, %arg2: i32) -> (i32, i32, i32) {
    %c0_i32 = arith.constant 0 : i32
    return %arg0, %arg1, %arg2 : i32, i32, i32
  }
}

</mosaic_0001>

<llo_original>
// kernel: nconv.1
$region0: #{nconv.1}
  #allocation0 [shape = 'u32[]', space=smem, size = 0x4, offset = 0x4, fixed_abs, tag = 'smem constant byte address 0x4 - core index']
  #allocation1 [shape = 'u32[144,128]{1,0:T(1,128)}', space=vmem, size = 0x12000, scoped, tag = 'internal scratch']
  %s0 = inlined_call_operand.vmem [shape: f32[1,16,16], index: 0, kind: input, shape index: {}]
  %s1 = inlined_call_operand.vmem [shape: bf16[2,16,96], index: 1, kind: input, shape index: {}]
  %s2 = inlined_call_operand.vmem [shape: f32[2,16,96], index: 2, kind: output, shape index: {}]
  %s3 = sld [smem:[#allocation0]]
  $region41: #{nconv.1} parent=0
    _
  %s5 = ssub.s32 1, %s3
  %s6 = scalar_select 0, %s5, %s3
  loop: start=0, step=1, limit=4
  $region2: #{nconv.1} parent=0 // loop_pre_header
    _
  $region3: #{nconv.1} parent=0 // loop_header
    %s8 = sphi 0, %s12
    %p9 = scmp.ge.s32.totalorder %s8, 4
    %s15 = sphi 0, %s34
    %s16 = sphi 0, %s30
    %s17 = sphi 0, %s26
    %s18 = sphi 0, %s15
    %s19 = sphi 0, %s16
    %s20 = sphi 0, %s17
    %s21 = sphi 0, %s18
    %s22 = sphi 0, %s19
    %s23 = sphi 0, %s20
    %s37 = sphi 0, %s39
    %s40 = sphi 0, %s37
    %s41 = sphi 0, %s40
    %s57 = sphi 0, %s41
    %s65 = sphi 0, %s67
    %s68 = sphi 0, %s65
    %s69 = sphi 0, %s68
    %s85 = sphi 0, %s69
    %s95 = sphi 0, %s97
    %s98 = sphi 0, %s95
    %s99 = sphi 0, %s98
    %s115 = sphi 0, %s99
  $region4: #{nconv.1} parent=0 // loop_header_branch
    %11 = sbr.rel (%p9) target = $region8
  $region5: #{nconv.1} parent=0 // loop_body
    %s13 = ssub.s32 %s8, 1
    %s14 = ssub.s32 %s8, 2
    %s24 = sadd.s32 1, %s17
    %p25 = scmp.ge.s32.totalorder %s24, 1
    %s26 = scalar_select %p25, 0, %s24
    %s27 = sadd.s32 1, %s16
    %s28 = scalar_select %p25, %s27, %s16
    %p29 = scmp.ge.s32.totalorder %s28, 1
    %s30 = scalar_select %p29, 0, %s28
    %s31 = sadd.s32 1, %s15
    %s32 = scalar_select %p29, %s31, %s15
    %p33 = scmp.ge.s32.totalorder %s32, 2
    %s34 = scalar_select %p33, 0, %s32
    %s35 = ssub.s32 %s16, %s30
    %p36 = scmp.eq.s32.totalorder %s35, 0
    %s38 = sadd.s32 %s37, 1
    %s39 = scalar_select %p36, %s37, %s38
    %p42 = pneg %p36
    %p43 = scmp.eq.s32.totalorder %s8, 1
    %p44 = por %p42, %p43
    %p45 = scmp.ne.s32.totalorder %s37, %s40
    %p46 = scmp.eq.s32.totalorder %s8, 0
    %p47 = por %p45, %p46
    %p48 = scmp.ne.s32.totalorder %s37, %s40
    %p49 = scmp.eq.s32.totalorder %s13, 1
    %p50 = por %p48, %p49
    %p51 = scmp.ne.s32.totalorder %s40, %s41
    %p52 = scmp.eq.s32.totalorder %s13, 0
    %p53 = por %p51, %p52
    %p54 = scmp.ne.s32.totalorder %s40, %s41
    %p55 = scmp.eq.s32.totalorder %s14, 1
    %p56 = por %p54, %p55
    %p58 = scmp.ne.s32.totalorder %s41, %s57
    %p59 = scmp.eq.s32.totalorder %s14, 0
    %p60 = por %p58, %p59
    %s61 = ssub.s32 %s15, %s34
    %s62 = ssub.s32 %s17, %s26
    %s63 = sor.u32 %s61, %s62
    %p64 = scmp.eq.s32.totalorder %s63, 0
    %s66 = sadd.s32 %s65, 1
    %s67 = scalar_select %p64, %s65, %s66
    %p70 = pneg %p64
    %p71 = scmp.eq.s32.totalorder %s8, 1
    %p72 = por %p70, %p71
    %p73 = scmp.ne.s32.totalorder %s65, %s68
    %p74 = scmp.eq.s32.totalorder %s8, 0
    %p75 = por %p73, %p74
    %p76 = scmp.ne.s32.totalorder %s65, %s68
    %p77 = scmp.eq.s32.totalorder %s13, 1
    %p78 = por %p76, %p77
    %p79 = scmp.ne.s32.totalorder %s68, %s69
    %p80 = scmp.eq.s32.totalorder %s13, 0
    %p81 = por %p79, %p80
    %p82 = scmp.ne.s32.totalorder %s68, %s69
    %p83 = scmp.eq.s32.totalorder %s14, 1
    %p84 = por %p82, %p83
    %p86 = scmp.ne.s32.totalorder %s69, %s85
    %p87 = scmp.eq.s32.totalorder %s14, 0
    %p88 = por %p86, %p87
    %s89 = ssub.s32 %s15, %s34
    %s90 = ssub.s32 %s16, %s30
    %s91 = sor.u32 %s89, %s90
    %s92 = ssub.s32 %s17, %s26
    %s93 = sor.u32 %s91, %s92
    %p94 = scmp.eq.s32.totalorder %s93, 0
    %s96 = sadd.s32 %s95, 1
    %s97 = scalar_select %p94, %s95, %s96
    %p100 = pneg %p94
    %p101 = scmp.eq.s32.totalorder %s8, 1
    %p102 = por %p100, %p101
    %p103 = scmp.ne.s32.totalorder %s95, %s98
    %p104 = scmp.eq.s32.totalorder %s8, 0
    %p105 = por %p103, %p104
    %p106 = scmp.ne.s32.totalorder %s95, %s98
    %p107 = scmp.eq.s32.totalorder %s13, 1
    %p108 = por %p106, %p107
    %p109 = scmp.ne.s32.totalorder %s98, %s99
    %p110 = scmp.eq.s32.totalorder %s13, 0
    %p111 = por %p109, %p110
    %p112 = scmp.ne.s32.totalorder %s98, %s99
    %p113 = scmp.eq.s32.totalorder %s14, 1
    %p114 = por %p112, %p113
    %p116 = scmp.ne.s32.totalorder %s99, %s115
    %p117 = scmp.eq.s32.totalorder %s14, 0
    %p118 = por %p116, %p117
    %p119 = scmp.le.s32.totalorder 1, %s8
    %p120 = scmp.lt.s32.totalorder %s8, 3
    %p121 = pnand %p119, %p120
    %p122 = pneg %p121
    // Predicated region
    $region9: #{nconv.1} parent=5 // pred_check
      _
    $region10: #{nconv.1} parent=5 // pred_check_branch
      %124 = sbr.rel (%p121) target = $region12
    $region11: #{nconv.1} parent=5 // pred_region
      %s125 = ssub.s32 %s8, 1
      // Predicated region
      $region13: #{nconv.1} parent=11 // pred_check
        %p126 = pneg %p53
      $region14: #{nconv.1} parent=11 // pred_check_branch
        %128 = sbr.rel (%p126) target = $region16
      $region15: #{nconv.1} parent=11 // pred_region
        %s129 = smul.u32 2, %s19
        %p130 = scmp.lt.s32.totalorder %s129, 1
        %s131 = scalar_select %p130, %s129, 1
        %s132 = smul.addr %s131, 8
        %s133 = scalar_lea.vmem %s0, %s132
        %s134 = smul.u32 2, %s19
      $region16: #{nconv.1} parent=11 // pred_fallthru
        _
    $region12: #{nconv.1} parent=5 // pred_fallthru
      _
    %p135 = scmp.lt.s32.totalorder %s8, 2
    // Predicated region
    $region17: #{nconv.1} parent=5 // pred_check
      %p136 = pneg %p135
    $region18: #{nconv.1} parent=5 // pred_check_branch
      %138 = sbr.rel (%p136) target = $region20
    $region19: #{nconv.1} parent=5 // pred_region
      // Predicated region
      $region21: #{nconv.1} parent=19 // pred_check
        %p139 = pneg %p75
      $region22: #{nconv.1} parent=19 // pred_check_branch
        %141 = sbr.rel (%p139) target = $region24
      $region23: #{nconv.1} parent=19 // pred_region
        %p142 = scmp.lt.s32.totalorder %s15, 1
        %s143 = scalar_select %p142, %s15, 1
        %p144 = scmp.lt.s32.totalorder %s17, 0
        %s145 = scalar_select %p144, %s17, 0
        %s146 = smul.addr %s143, 2
        %s147 = sadd.s32 %s145, %s146
        %s148 = smul.addr %s147, 4
        %s149 = scalar_lea.vmem %s1, %s148
      $region24: #{nconv.1} parent=19 // pred_fallthru
        _
    $region20: #{nconv.1} parent=5 // pred_fallthru
      _
    %p150 = scmp.le.s32.totalorder 1, %s8
    %p151 = scmp.lt.s32.totalorder %s8, 3
    %p152 = pnand %p150, %p151
    %p153 = pneg %p152
    // Predicated region
    $region25: #{nconv.1} parent=5 // pred_check
      _
    $region26: #{nconv.1} parent=5 // pred_check_branch
      %155 = sbr.rel (%p152) target = $region28
    $region27: #{nconv.1} parent=5 // pred_region
      %s156 = ssub.s32 %s8, 1
      %s157 = smul.u32 2, %s19
      %p158 = scmp.lt.s32.totalorder %s157, 1
      %s159 = scalar_select %p158, %s157, 1
      %s160 = smul.addr %s159, 8
      %s161 = scalar_lea.vmem %s0, %s160
      %p162 = pneg %p53
      %p163 = pneg %p50
      %p164 = scmp.lt.s32.totalorder %s18, 1
      %s165 = scalar_select %p164, %s18, 1
      %p166 = scmp.lt.s32.totalorder %s20, 0
      %s167 = scalar_select %p166, %s20, 0
      %s168 = smul.addr %s165, 2
      %s169 = sadd.s32 %s167, %s168
      %s170 = smul.addr %s169, 4
      %s171 = scalar_lea.vmem %s1, %s170
      %p172 = pneg %p81
      %p173 = pneg %p78
      %p174 = pneg %p111
      %p175 = pneg %p108
      %s176 = smul.u32 2, %s19
      %p177 = scmp.lt.s32.totalorder %s18, 1
      %s178 = scalar_select %p177, %s18, 1
      %p179 = scmp.lt.s32.totalorder %s176, 1
      %s180 = scalar_select %p179, %s176, 1
      %p181 = scmp.lt.s32.totalorder %s20, 0
      %s182 = scalar_select %p181, %s20, 0
      %s183 = sadd.s32 %s182, %s180
      %s184 = smul.addr %s178, 2
      %s185 = sadd.s32 %s183, %s184
      %s186 = smul.addr %s185, 8
      %s187 = scalar_lea.vmem %s2, %s186
      %s188 = smul.u32 2, %s19
      %p189 = scmp.lt.s32.totalorder %s188, 1
      %s190 = scalar_select %p189, %s188, 1
      %s191 = smul.addr %s190, 8
      %s192 = scalar_lea.vmem %s0, %s191
      %s193 = smul.u32 2, %s19
      %p194 = scmp.lt.s32.totalorder %s18, 1
      %s195 = scalar_select %p194, %s18, 1
      %p196 = scmp.lt.s32.totalorder %s20, 0
      %s197 = scalar_select %p196, %s20, 0
      %s198 = smul.addr %s195, 2
      %s199 = sadd.s32 %s197, %s198
      %s200 = smul.addr %s199, 4
      %s201 = scalar_lea.vmem %s1, %s200
      %s202 = smul.u32 2, %s19
      %p203 = scmp.lt.s32.totalorder %s18, 1
      %s204 = scalar_select %p203, %s18, 1
      %p205 = scmp.lt.s32.totalorder %s202, 1
      %s206 = scalar_select %p205, %s202, 1
      %p207 = scmp.lt.s32.totalorder %s20, 0
      %s208 = scalar_select %p207, %s20, 0
      %s209 = sadd.s32 %s208, %s206
      %s210 = smul.addr %s204, 2
      %s211 = sadd.s32 %s209, %s210
      %s212 = smul.addr %s211, 8
      %s213 = scalar_lea.vmem %s2, %s212
      %s214 = smul.u32 2, %s19
      %v216 = vld [vmem:[%s192] sm:$0xff]
      %v217 = vld [vmem:[%s192 + $0x8] sm:$0xff]
      %v218 = vpack.c.bf16 %v217, %v216
      %v219 = vld [vmem:[%s201] sm:$0xf]
      %v220 = vld [vmem:[%s201 + $0x4] sm:$0xf]
      %v223 = vunpack.c.l.b16 %v219
      %v224 = vunpack.c.l.b16 %v220
      %v225 = vpack.c.b16 %v224, %v223
      %vm227 = vcmask 130048
      %v229 = vsel %vm227, %v218, 0
      %231 = vmatprep.subr.bf16.mxu0 0
      %232 = vmatpush1.bf16.msra.mxu0 %v225
      %233 = vmatprep.subr.bf16.mxu0 0
      %234 = vmatpush1.bf16.msra.mxu0 0
      %235 = vmatprep.subr.bf16.mxu0 0
      %236 = vmatpush1.bf16.msra.mxu0 0
      %237 = vmatprep.subr.bf16.mxu0 0
      %238 = vmatpush1.bf16.msra.mxu0 0
      %239 = vmatprep.subr.bf16.mxu0 0
      %240 = vmatpush1.bf16.msra.mxu0 0
      %241 = vmatprep.subr.bf16.mxu0 0
      %242 = vmatpush1.bf16.msra.mxu0 0
      %243 = vmatprep.subr.bf16.mxu0 0
      %244 = vmatpush1.bf16.msra.mxu0 0
      %245 = vmatprep.subr.bf16.mxu0 0
      %246 = vmatpush1.bf16.msra.mxu0 0
      %247 = vmatprep.subr.bf16.mxu0 0
      %248 = vmatpush1.bf16.msra.mxu0 0
      %249 = vmatprep.subr.bf16.mxu0 0
      %250 = vmatpush1.bf16.msra.mxu0 0
      %251 = vmatprep.subr.bf16.mxu0 0
      %252 = vmatpush1.bf16.msra.mxu0 0
      %253 = vmatprep.subr.bf16.mxu0 0
      %254 = vmatpush1.bf16.msra.mxu0 0
      %255 = vmatprep.subr.bf16.mxu0 0
      %256 = vmatpush1.bf16.msra.mxu0 0
      %257 = vmatprep.subr.bf16.mxu0 0
      %258 = vmatpush1.bf16.msra.mxu0 0
      %259 = vmatprep.subr.bf16.mxu0 0
      %260 = vmatpush1.bf16.msra.mxu0 0
      %261 = vmatprep.subr.bf16.mxu0 0
      %262 = vmatpush1.bf16.msra.mxu0 0
      %263 = vmatprep.mubr.bf16.mxu0 0
      %264 = vmatmul.mubr.bf16.gmra.mrb[0].mxu0 %v229
      %v265 = vpop.f32.mrb[0].mxu0
      %v266 = vadd.f32 0.0, %v265
      %v267 = vpop.f32.mrb[0].mxu0
      %v268 = vpop.f32.mrb[0].mxu0
      %v269 = vadd.f32 0.0, %v268
      %v270 = vpop.f32.mrb[0].mxu0
      %271 = vdwg.mxu0
      %vm272 = vcmask 785408
      %273 = vst.msk [vmem:[%s213] sm:$0xff] %vm272, %v266
      %274 = vst.msk [vmem:[%s213 + $0x8] sm:$0xff] %vm272, %v269
      %s275 = smul.u32 2, %s19
      %p276 = scmp.lt.s32.totalorder %s18, 1
      %s277 = scalar_select %p276, %s18, 1
      %p278 = scmp.lt.s32.totalorder %s275, 1
      %s279 = scalar_select %p278, %s275, 1
      %p280 = scmp.lt.s32.totalorder %s20, 0
      %s281 = scalar_select %p280, %s20, 0
      %s282 = sadd.s32 %s281, %s279
      %s283 = smul.addr %s277, 2
      %s284 = sadd.s32 %s282, %s283
      %s285 = smul.addr %s284, 8
      %s286 = scalar_lea.vmem %s2, %s285
      // Predicated region
      $region29: #{nconv.1} parent=27 // pred_check
        %p287 = pneg %p108
      $region30: #{nconv.1} parent=27 // pred_check_branch
        %289 = sbr.rel (%p287) target = $region32
      $region31: #{nconv.1} parent=27 // pred_region
        %s290 = smul.u32 2, %s19
      $region32: #{nconv.1} parent=27 // pred_fallthru
        _
    $region28: #{nconv.1} parent=5 // pred_fallthru
      _
    %p291 = scmp.le.s32.totalorder 2, %s8
    // Predicated region
    $region33: #{nconv.1} parent=5 // pred_check
      %p292 = pneg %p291
    $region34: #{nconv.1} parent=5 // pred_check_branch
      %294 = sbr.rel (%p292) target = $region36
    $region35: #{nconv.1} parent=5 // pred_region
      %s295 = ssub.s32 %s8, 2
      // Predicated region
      $region37: #{nconv.1} parent=35 // pred_check
        %p296 = pneg %p114
      $region38: #{nconv.1} parent=35 // pred_check_branch
        %298 = sbr.rel (%p296) target = $region40
      $region39: #{nconv.1} parent=35 // pred_region
        %s299 = smul.u32 2, %s22
        %p300 = scmp.lt.s32.totalorder %s21, 1
        %s301 = scalar_select %p300, %s21, 1
        %p302 = scmp.lt.s32.totalorder %s299, 1
        %s303 = scalar_select %p302, %s299, 1
        %p304 = scmp.lt.s32.totalorder %s23, 0
        %s305 = scalar_select %p304, %s23, 0
        %s306 = sadd.s32 %s305, %s303
        %s307 = smul.addr %s301, 2
        %s308 = sadd.s32 %s306, %s307
        %s309 = smul.addr %s308, 8
        %s310 = scalar_lea.vmem %s2, %s309
      $region40: #{nconv.1} parent=35 // pred_fallthru
        _
    $region36: #{nconv.1} parent=5 // pred_fallthru
      _
  $region6: #{nconv.1} parent=0 // loop_footer
    %s12 = sadd.s32 1, %s8
  $region7: #{nconv.1} parent=0 // loop_footer_branch
    %7 = sbr.rel target = $region3
  $region8: #{nconv.1} parent=0 // loop_exit
    _

</llo_original>
